<compile_context>
chip_gen: v7x
topology: tpu7x:2x2x1
jax: 0.10.0
libtpu: 0.0.40
codegen_flags: <defaults>
</compile_context>

<pallas_src>
import functools

import jax
import jax.numpy as jnp
from jax.experimental import pallas as pl
from jax.experimental.pallas import tpu as pltpu


def _round_up(x, m):
    return (x + m - 1) // m * m


# ----------------------------- Pallas matmul -------------------------------

def _matmul_kernel(*refs, apply_relu, has_addend, multi_k):
    a_ref, b_ref, bias_ref = refs[0], refs[1], refs[2]
    idx = 3
    add_ref = None
    if has_addend:
        add_ref = refs[idx]
        idx += 1
    o_ref = refs[idx]
    idx += 1
    acc_ref = refs[idx] if multi_k else None

    def epilogue(acc):
        r = acc + bias_ref[...]
        if has_addend:
            r = r + add_ref[...]
        if apply_relu:
            r = jnp.maximum(r, 0.0)
        o_ref[...] = r.astype(o_ref.dtype)

    if multi_k:
        @pl.when(pl.program_id(2) == 0)
        def _():
            acc_ref[...] = jnp.zeros_like(acc_ref)

        acc_ref[...] += jnp.dot(a_ref[...], b_ref[...],
                                preferred_element_type=jnp.float32)

        @pl.when(pl.program_id(2) == pl.num_programs(2) - 1)
        def _():
            epilogue(acc_ref[...])
    else:
        epilogue(jnp.dot(a_ref[...], b_ref[...],
                         preferred_element_type=jnp.float32))


def _pick_k_tiling(K, max_tk=1152):
    """Return (tk, n_k_steps) minimising padded-K, preferring fewer steps."""
    Kr = _round_up(K, 128)
    if Kr <= max_tk:
        # Single k-step.  Keep K unpadded when it is already lane-aligned.
        if K % 128 == 0:
            return K, 1
        return Kr, 1
    best_cand, best_tot, best_nk = None, None, None
    for cand in range(128, max_tk + 1, 128):
        nk = -(-K // cand)
        tot = nk * cand
        if best_tot is None or (tot, nk) < (best_tot, best_nk):
            best_cand, best_tot, best_nk = cand, tot, nk
    return best_cand, best_nk


def pallas_matmul(a, b, bias=None, relu=False, addend=None, tm=512, tn=512):
    """out = relu?(a @ b + bias [+ addend]); bf16 operands, f32 accumulation.

    a:(M,K) b:(K,N) bias:(N,) addend:(M,N); returns f32 (M,N).
    Tile sizes are clamped to the actual problem dims; K tiling is chosen to
    avoid padding the (potentially huge) im2col matrix where possible.
    """
    M, K = a.shape
    K2, N = b.shape
    assert K == K2
    a = a.astype(jnp.bfloat16)
    b = b.astype(jnp.bfloat16)

    tm_eff = min(tm, _round_up(M, 8))
    tn_eff = min(tn, _round_up(N, 128))
    tk_eff, nk = _pick_k_tiling(K)
    Mp = _round_up(M, tm_eff)
    Np = _round_up(N, tn_eff)
    Kp = tk_eff * nk

    a_p = a if (Mp == M and Kp == K) else jnp.pad(a, ((0, Mp - M), (0, Kp - K)))
    b_p = b if (Kp == K and Np == N) else jnp.pad(b, ((0, Kp - K), (0, Np - N)))

    if bias is None:
        bias = jnp.zeros((N,), jnp.float32)
    bias_p = bias.astype(jnp.float32)
    if Np != N:
        bias_p = jnp.pad(bias_p, (0, Np - N))
    bias_p = bias_p.reshape(1, Np)

    has_addend = addend is not None
    inputs = [a_p, b_p, bias_p]
    if has_addend:
        add_p = addend.astype(jnp.float32)
        if Mp != M or Np != N:
            add_p = jnp.pad(add_p, ((0, Mp - M), (0, Np - N)))
        inputs.append(add_p)

    multi_k = nk > 1
    if multi_k:
        grid = (Mp // tm_eff, Np // tn_eff, nk)
        in_specs = [
            pl.BlockSpec((tm_eff, tk_eff), lambda i, j, k: (i, k)),
            pl.BlockSpec((tk_eff, tn_eff), lambda i, j, k: (k, j)),
            pl.BlockSpec((1, tn_eff), lambda i, j, k: (0, j)),
        ]
        if has_addend:
            in_specs.append(pl.BlockSpec((tm_eff, tn_eff), lambda i, j, k: (i, j)))
        out_specs = pl.BlockSpec((tm_eff, tn_eff), lambda i, j, k: (i, j))
        scratch = [pltpu.VMEM((tm_eff, tn_eff), jnp.float32)]
        dim_sem = ("parallel", "parallel", "arbitrary")
    else:
        grid = (Mp // tm_eff, Np // tn_eff)
        in_specs = [
            pl.BlockSpec((tm_eff, tk_eff), lambda i, j: (i, 0)),
            pl.BlockSpec((tk_eff, tn_eff), lambda i, j: (0, j)),
            pl.BlockSpec((1, tn_eff), lambda i, j: (0, j)),
        ]
        if has_addend:
            in_specs.append(pl.BlockSpec((tm_eff, tn_eff), lambda i, j: (i, j)))
        out_specs = pl.BlockSpec((tm_eff, tn_eff), lambda i, j: (i, j))
        scratch = []
        dim_sem = ("parallel", "parallel")

    kernel = functools.partial(_matmul_kernel, apply_relu=relu,
                               has_addend=has_addend, multi_k=multi_k)
    out = pl.pallas_call(
        kernel,
        out_shape=jax.ShapeDtypeStruct((Mp, Np), jnp.float32),
        grid_spec=pltpu.PrefetchScalarGridSpec(
            num_scalar_prefetch=0,
            grid=grid,
            in_specs=in_specs,
            out_specs=out_specs,
            scratch_shapes=scratch,
        ),
        compiler_params=pltpu.CompilerParams(
            dimension_semantics=dim_sem,
            vmem_limit_bytes=32 * 1024 * 1024),
    )(*inputs)
    if Mp != M or Np != N:
        out = out[:M, :N]
    return out


# ------------------------------- max pool ----------------------------------

def _maxpool_kernel(x_ref, o_ref):
    # x_ref block: (th, 2, Wo, 2*C)  (H pair on axis 1, W pair folded into lanes)
    x = x_ref[...]
    c = o_ref.shape[-1]
    m = jnp.maximum(x[:, 0], x[:, 1])          # max over the H pair
    o_ref[...] = jnp.maximum(m[..., :c], m[..., c:])   # max over the W pair


def maxpool2x2_ceil(x):
    """2x2 max-pool, stride 2, ceil_mode=True.  Single streaming Pallas pass."""
    N, H, W, C = x.shape
    Ho, Wo = -(-H // 2), -(-W // 2)
    th = min(8, Ho)
    Ho_p = _round_up(Ho, th)
    pad_h = 2 * Ho_p - H
    pad_w = 2 * Wo - W
    if pad_h or pad_w:
        x = jnp.pad(x, ((0, 0), (0, pad_h), (0, pad_w), (0, 0)),
                    constant_values=-jnp.inf)
    # Free (contiguous) reshape: (N, 2*Ho_p, 2*Wo, C) -> (N*Ho_p, 2, Wo, 2*C)
    xr = x.reshape(N * Ho_p, 2, Wo, 2 * C)
    rows = N * Ho_p
    out = pl.pallas_call(
        _maxpool_kernel,
        out_shape=jax.ShapeDtypeStruct((rows, Wo, C), x.dtype),
        grid=(rows // th,),
        in_specs=[pl.BlockSpec((th, 2, Wo, 2 * C), lambda i: (i, 0, 0, 0))],
        out_specs=pl.BlockSpec((th, Wo, C), lambda i: (i, 0, 0)),
        compiler_params=pltpu.CompilerParams(
            dimension_semantics=("parallel",)),
    )(xr)
    return out.reshape(N, Ho_p, Wo, C)[:, :Ho]


# ------------------------------ conv / resize -------------------------------

def conv2d(x, w, b, padding, relu):
    """x:(N,H,W,Cin), w:(KH,KW,Cin,Cout), b:(Cout,). Conv via bf16 im2col + Pallas matmul."""
    N, H, W, Cin = x.shape
    KH, KW, _, Cout = w.shape
    xb = x.astype(jnp.bfloat16)
    B = w.astype(jnp.bfloat16).reshape(KH * KW * Cin, Cout)

    if KH == 1 and KW == 1 and padding == 0:
        Ho, Wo = H, W
        A = xb.reshape(N * H * W, Cin)
    else:
        xp = jnp.pad(xb, ((0, 0), (padding, padding), (padding, padding), (0, 0)))
        Ho = H + 2 * padding - KH + 1
        Wo = W + 2 * padding - KW + 1
        patches = [xp[:, dy:dy + Ho, dx:dx + Wo, :]
                   for dy in range(KH) for dx in range(KW)]
        A = jnp.concatenate(patches, axis=-1).reshape(N * Ho * Wo, KH * KW * Cin)

    out = pallas_matmul(A, B, bias=b, relu=relu)
    return out.reshape(N, Ho, Wo, Cout)


def _bilinear_matrix(out_size, in_size):
    """Interpolation matrix R (out,in) for bilinear, align_corners=True."""
    if in_size == 1:
        return jnp.ones((out_size, 1), jnp.float32)
    if out_size == 1:
        pos = jnp.zeros((1,), jnp.float32)
    else:
        pos = jnp.arange(out_size, dtype=jnp.float32) * (
            (in_size - 1) / (out_size - 1))
    i0 = jnp.clip(jnp.floor(pos), 0, in_size - 2).astype(jnp.int32)
    frac = pos - i0.astype(jnp.float32)
    R = (jax.nn.one_hot(i0, in_size, dtype=jnp.float32) * (1.0 - frac)[:, None]
         + jax.nn.one_hot(i0 + 1, in_size, dtype=jnp.float32) * frac[:, None])
    return R


def upsample_bilinear(x, out_h, out_w, addend=None):
    """Matches F.upsample_bilinear (bilinear, align_corners=True).

    If `addend` (N,out_h,out_w,C) is given, it is fused into the epilogue of
    the second interpolation matmul (score += score_poolX without extra kernel).
    """
    N, Hi, Wi, C = x.shape
    Rh = _bilinear_matrix(out_h, Hi)
    Rw = _bilinear_matrix(out_w, Wi)
    # rows
    xt = x.transpose(1, 0, 2, 3).reshape(Hi, N * Wi * C)
    t = pallas_matmul(Rh, xt)                                  # (Ho, N*Wi*C)
    t = t.reshape(out_h, N, Wi, C).transpose(2, 1, 0, 3)       # (Wi, N, Ho, C)
    tt = t.reshape(Wi, N * out_h * C)
    # cols (+ fused residual add)
    add2 = None
    if addend is not None:
        add2 = addend.transpose(2, 0, 1, 3).reshape(out_w, N * out_h * C)
    u = pallas_matmul(Rw, tt, addend=add2)                     # (Wo, N*Ho*C)
    u = u.reshape(out_w, N, out_h, C).transpose(1, 2, 0, 3)    # (N,Ho,Wo,C)
    return u


# ------------------------------ parameters ----------------------------------

def _conv_param(key, kh, kw, cin, cout):
    std = (2.0 / (kh * kw * cin)) ** 0.5
    w = jax.random.normal(key, (kh, kw, cin, cout), jnp.float32) * std
    b = jnp.zeros((cout,), jnp.float32)
    return w, b


def init_fcn8s_params(key, nb_classes=3):
    cfgs = {
        "block1": [(3, 64, 3, 100), (64, 64, 3, 1)],
        "block2": [(64, 128, 3, 1), (128, 128, 3, 1)],
        "block3": [(128, 256, 3, 1), (256, 256, 3, 1), (256, 256, 3, 1)],
        "block4": [(256, 512, 3, 1), (512, 512, 3, 1), (512, 512, 3, 1)],
        "block5": [(512, 512, 3, 1), (512, 512, 3, 1), (512, 512, 3, 1)],
    }
    params = {}
    idx = 0
    for name, layers in cfgs.items():
        ps = []
        for (cin, cout, k, pad) in layers:
            w, b = _conv_param(jax.random.fold_in(key, idx), k, k, cin, cout)
            idx += 1
            ps.append((w, b, pad))
        params[name] = ps
    params["fc6"] = _conv_param(jax.random.fold_in(key, 100), 7, 7, 512, 4096)
    params["fc7"] = _conv_param(jax.random.fold_in(key, 101), 1, 1, 4096, 4096)
    params["score"] = _conv_param(jax.random.fold_in(key, 102), 1, 1, 4096, nb_classes)
    params["score_pool4"] = _conv_param(jax.random.fold_in(key, 103), 1, 1, 512, nb_classes)
    params["score_pool3"] = _conv_param(jax.random.fold_in(key, 104), 1, 1, 256, nb_classes)
    return params


# -------------------------------- forward -----------------------------------

def fcn8s_forward(params, x_nchw):
    x = jnp.transpose(x_nchw, (0, 2, 3, 1)).astype(jnp.float32)  # NCHW -> NHWC
    N, H, W, _ = x.shape

    def block(h, layers):
        for (w, b, pad) in layers:
            h = conv2d(h, w, b, pad, relu=True)
        return maxpool2x2_ceil(h)

    feat1 = block(x, params["block1"])
    feat2 = block(feat1, params["block2"])
    feat3 = block(feat2, params["block3"])
    feat4 = block(feat3, params["block4"])
    feat5 = block(feat4, params["block5"])

    # classifier head
    # TODO(synk): nn.Dropout2d (training-mode RNG) has no deterministic equivalent;
    #             treated as identity (inference semantics).
    h = conv2d(feat5, params["fc6"][0], params["fc6"][1], padding=0, relu=True)
    h = conv2d(h, params["fc7"][0], params["fc7"][1], padding=0, relu=True)
    score = conv2d(h, params["score"][0], params["score"][1], padding=0, relu=False)

    score_pool4 = conv2d(feat4, params["score_pool4"][0], params["score_pool4"][1],
                         padding=0, relu=False)
    score_pool3 = conv2d(feat3, params["score_pool3"][0], params["score_pool3"][1],
                         padding=0, relu=False)

    # score += score_pool4 / score_pool3 fused into the upsample matmul epilogues
    score = upsample_bilinear(score, score_pool4.shape[1], score_pool4.shape[2],
                              addend=score_pool4)
    score = upsample_bilinear(score, score_pool3.shape[1], score_pool3.shape[2],
                              addend=score_pool3)
    out = upsample_bilinear(score, H, W)
    return jnp.transpose(out, (0, 3, 1, 2))  # NHWC -> NCHW


# ---------------------------------- main -------------------------------------

if __name__ == "__main__":
    key = jax.random.PRNGKey(0)
    pkey, xkey = jax.random.split(key)
    params = init_fcn8s_params(pkey, nb_classes=3)
    # Small input consistent with the module: NCHW, 3 input channels.
    x = jax.random.normal(xkey, (2, 3, 16, 16), jnp.float32)
    out = fcn8s_forward(params, x)
    out = jax.block_until_ready(out)
    assert out.shape == (2, 3, 16, 16), out.shape
    assert bool(jnp.isfinite(out).all())
    print("KERNEL_OK")
</pallas_src>

<mosaic_0001>
module attributes {stable_mosaic.version = 11 : i64} {
  func.func @_matmul_kernel(%arg0: i32, %arg1: i32, %arg2: memref<512x128xbf16, #tpu.memory_space<vmem>>, %arg3: memref<128x128xbf16, #tpu.memory_space<vmem>>, %arg4: memref<1x128xf32, #tpu.memory_space<vmem>>, %arg5: memref<512x128xf32, #tpu.memory_space<vmem>>) attributes {dimension_semantics = [#tpu.dimension_semantics<parallel>, #tpu.dimension_semantics<parallel>], iteration_bounds = array<i64: 179, 1>, scalar_prefetch = 0 : i64, scratch_operands = 0 : i64, tpu.core_type = #tpu.core_type<tc>, window_params = [{transform_indices = @transform_0, window_bounds = array<i64: 512, 128>}, {transform_indices = @transform_1, window_bounds = array<i64: 128, 128>}, {transform_indices = @transform_2, window_bounds = array<i64: 1, 128>}, {transform_indices = @transform_3, window_bounds = array<i64: 512, 128>}]} {
    %c0 = arith.constant 0 : index
    %c0_0 = arith.constant 0 : index
    %0 = vector.load %arg2[%c0, %c0_0] : memref<512x128xbf16, #tpu.memory_space<vmem>>, vector<512x128xbf16>
    %c0_1 = arith.constant 0 : index
    %c0_2 = arith.constant 0 : index
    %1 = vector.load %arg3[%c0_1, %c0_2] : memref<128x128xbf16, #tpu.memory_space<vmem>>, vector<128x128xbf16>
    %cst = arith.constant dense<0.000000e+00> : vector<512x128xf32>
    %2 = tpu.matmul %0, %1, %cst {dimension_numbers = #tpu.dot_dimension_numbers<[1], [0], [0], [1], [0, 0, 1, 1], [], []>} : vector<512x128xbf16>, vector<128x128xbf16>, vector<512x128xf32> -> vector<512x128xf32>
    %c0_3 = arith.constant 0 : index
    %c0_4 = arith.constant 0 : index
    %3 = vector.load %arg4[%c0_3, %c0_4] : memref<1x128xf32, #tpu.memory_space<vmem>>, vector<1x128xf32>
    %4 = vector.broadcast %3 : vector<1x128xf32> to vector<512x128xf32>
    %5 = arith.addf %2, %4 : vector<512x128xf32>
    %cst_5 = arith.constant 0.000000e+00 : f32
    %6 = vector.broadcast %cst_5 : f32 to vector<512x128xf32>
    %7 = arith.maximumf %5, %6 : vector<512x128xf32>
    %c0_6 = arith.constant 0 : index
    %c0_7 = arith.constant 0 : index
    %8 = vector.load %arg5[%c0_6, %c0_7] : memref<512x128xf32, #tpu.memory_space<vmem>>, vector<512x128xf32>
    tpu.vector_store %arg5[%c0_6, %c0_7], %7 {strides = array<i32>} : memref<512x128xf32, #tpu.memory_space<vmem>>, vector<512x128xf32>,
    return
  }
  func.func @transform_0(%arg0: i32, %arg1: i32) -> (i32, i32) {
    %c0_i32 = arith.constant 0 : i32
    %c0_i32_0 = arith.constant 0 : i32
    return %arg0, %c0_i32 : i32, i32
  }
  func.func @transform_1(%arg0: i32, %arg1: i32) -> (i32, i32) {
    %c0_i32 = arith.constant 0 : i32
    %c0_i32_0 = arith.constant 0 : i32
    return %c0_i32, %arg1 : i32, i32
  }
  func.func @transform_2(%arg0: i32, %arg1: i32) -> (i32, i32) {
    %c0_i32 = arith.constant 0 : i32
    %c0_i32_0 = arith.constant 0 : i32
    return %c0_i32, %arg1 : i32, i32
  }
  func.func @transform_3(%arg0: i32, %arg1: i32) -> (i32, i32) {
    %c0_i32 = arith.constant 0 : i32
    return %arg0, %arg1 : i32, i32
  }
}

</mosaic_0001>

<llo_original>
// kernel: tpu_custom_call.1
$region0: #{tpu_custom_call.1}
  #allocation0 [shape = 'u32[]', space=smem, size = 0x4, offset = 0x4, fixed_abs, tag = 'smem constant byte address 0x4 - core index']
  #allocation1 [shape = 'u32[144,128]{1,0:T(1,128)}', space=vmem, size = 0x12000, scoped, tag = 'internal scratch']
  %s0 = inlined_call_operand.hbm [shape: bf16[91648,128], index: 0, kind: input, shape index: {}]
  %s1 = inlined_call_operand.hbm [shape: bf16[128,128], index: 1, kind: input, shape index: {}]
  %s2 = inlined_call_operand.hbm [shape: f32[1,128], index: 2, kind: input, shape index: {}]
  %s3 = inlined_call_operand.hbm [shape: f32[91648,128], index: 3, kind: output, shape index: {}]
  %s4 = sld [smem:[#allocation0]]
  $region57: #{tpu_custom_call.1} parent=0
    _
  %s6 = ssub.s32 1, %s4
  %s7 = scalar_select 0, %s6, %s4
  $region1: #{tpu_custom_call.1} parent=0
    #allocation2 [shape = 'u8[262144]{0}', space=vmem, size = 0x40000, scoped, tag = 'input window, operand 0']
    #allocation3 [shape = 's32[2]{0}', space=sflag, size = 0x8, scoped, tag = 'scoped memory for tpu_custom_call.1']
    #allocation4 [shape = 's32[2]{0}', space=sflag, size = 0x8, scoped, tag = 'scoped memory for tpu_custom_call.1']
    #allocation5 [shape = 'u8[32768]{0}', space=vmem, size = 0x8000, scoped, tag = 'input window, operand 1, single buffered']
    #allocation6 [shape = 's32[1]{0}', space=sflag, size = 0x4, scoped, tag = 'scoped memory for tpu_custom_call.1']
    #allocation7 [shape = 'u8[512]{0}', space=vmem, size = 0x400, scoped, tag = 'input window, operand 2, single buffered']
    #allocation8 [shape = 'u8[524288]{0}', space=vmem, size = 0x80000, scoped, tag = 'output window, operand 0']
    %8 = vsyncpa [#allocation3], 0
    %s9 = scalar_lea.sflag [#allocation3], 1
    %10 = vsyncpa %s9, 0
    %11 = vsyncpa [#allocation6], 0
    %12 = vsyncpa [#allocation4], 0
    %s13 = scalar_lea.sflag [#allocation4], 1
    %14 = vsyncpa %s13, 0
    loop: start=0, step=1, limit=181
    $region2: #{tpu_custom_call.1} parent=1 // loop_pre_header
      _
    $region3: #{tpu_custom_call.1} parent=1 // loop_header
      %s16 = sphi 0, %s20
      %p17 = scmp.ge.s32.totalorder %s16, 181
      %s23 = sphi 0, %s35
      %s24 = sphi 0, %s31
      %s25 = sphi 0, %s23
      %s26 = sphi 0, %s24
      %s27 = sphi 0, %s25
      %s28 = sphi 0, %s26
      %s38 = sphi 0, %s40
      %s41 = sphi 0, %s38
      %s42 = sphi 0, %s41
      %s58 = sphi 0, %s42
      %s64 = sphi 0, %s66
      %s67 = sphi 0, %s64
      %s68 = sphi 0, %s67
      %s84 = sphi 0, %s68
      %s90 = sphi 0, %s92
      %s93 = sphi 0, %s90
      %s94 = sphi 0, %s93
      %s110 = sphi 0, %s94
      %s118 = sphi 0, %s120
      %s121 = sphi 0, %s118
      %s122 = sphi 0, %s121
      %s138 = sphi 0, %s122
    $region4: #{tpu_custom_call.1} parent=1 // loop_header_branch
      %19 = sbr.rel (%p17) target = $region8
    $region5: #{tpu_custom_call.1} parent=1 // loop_body
      %s21 = ssub.s32 %s16, 1
      %s22 = ssub.s32 %s16, 2
      %s29 = sadd.s32 1, %s24
      %p30 = scmp.ge.s32.totalorder %s29, 1
      %s31 = scalar_select %p30, 0, %s29
      %s32 = sadd.s32 1, %s23
      %s33 = scalar_select %p30, %s32, %s23
      %p34 = scmp.ge.s32.totalorder %s33, 179
      %s35 = scalar_select %p34, 0, %s33
      %s36 = ssub.s32 %s23, %s35
      %p37 = scmp.eq.s32.totalorder %s36, 0
      %s39 = sadd.s32 %s38, 1
      %s40 = scalar_select %p37, %s38, %s39
      %p43 = pneg %p37
      %p44 = scmp.eq.s32.totalorder %s16, 178
      %p45 = por %p43, %p44
      %p46 = scmp.ne.s32.totalorder %s38, %s41
      %p47 = scmp.eq.s32.totalorder %s16, 0
      %p48 = por %p46, %p47
      %p49 = scmp.ne.s32.totalorder %s38, %s41
      %p50 = scmp.eq.s32.totalorder %s21, 178
      %p51 = por %p49, %p50
      %p52 = scmp.ne.s32.totalorder %s41, %s42
      %p53 = scmp.eq.s32.totalorder %s21, 0
      %p54 = por %p52, %p53
      %p55 = scmp.ne.s32.totalorder %s41, %s42
      %p56 = scmp.eq.s32.totalorder %s22, 178
      %p57 = por %p55, %p56
      %p59 = scmp.ne.s32.totalorder %s42, %s58
      %p60 = scmp.eq.s32.totalorder %s22, 0
      %p61 = por %p59, %p60
      %s62 = ssub.s32 %s24, %s31
      %p63 = scmp.eq.s32.totalorder %s62, 0
      %s65 = sadd.s32 %s64, 1
      %s66 = scalar_select %p63, %s64, %s65
      %p69 = pneg %p63
      %p70 = scmp.eq.s32.totalorder %s16, 178
      %p71 = por %p69, %p70
      %p72 = scmp.ne.s32.totalorder %s64, %s67
      %p73 = scmp.eq.s32.totalorder %s16, 0
      %p74 = por %p72, %p73
      %p75 = scmp.ne.s32.totalorder %s64, %s67
      %p76 = scmp.eq.s32.totalorder %s21, 178
      %p77 = por %p75, %p76
      %p78 = scmp.ne.s32.totalorder %s67, %s68
      %p79 = scmp.eq.s32.totalorder %s21, 0
      %p80 = por %p78, %p79
      %p81 = scmp.ne.s32.totalorder %s67, %s68
      %p82 = scmp.eq.s32.totalorder %s22, 178
      %p83 = por %p81, %p82
      %p85 = scmp.ne.s32.totalorder %s68, %s84
      %p86 = scmp.eq.s32.totalorder %s22, 0
      %p87 = por %p85, %p86
      %s88 = ssub.s32 %s24, %s31
      %p89 = scmp.eq.s32.totalorder %s88, 0
      %s91 = sadd.s32 %s90, 1
      %s92 = scalar_select %p89, %s90, %s91
      %p95 = pneg %p89
      %p96 = scmp.eq.s32.totalorder %s16, 178
      %p97 = por %p95, %p96
      %p98 = scmp.ne.s32.totalorder %s90, %s93
      %p99 = scmp.eq.s32.totalorder %s16, 0
      %p100 = por %p98, %p99
      %p101 = scmp.ne.s32.totalorder %s90, %s93
      %p102 = scmp.eq.s32.totalorder %s21, 178
      %p103 = por %p101, %p102
      %p104 = scmp.ne.s32.totalorder %s93, %s94
      %p105 = scmp.eq.s32.totalorder %s21, 0
      %p106 = por %p104, %p105
      %p107 = scmp.ne.s32.totalorder %s93, %s94
      %p108 = scmp.eq.s32.totalorder %s22, 178
      %p109 = por %p107, %p108
      %p111 = scmp.ne.s32.totalorder %s94, %s110
      %p112 = scmp.eq.s32.totalorder %s22, 0
      %p113 = por %p111, %p112
      %s114 = ssub.s32 %s23, %s35
      %s115 = ssub.s32 %s24, %s31
      %s116 = sor.u32 %s114, %s115
      %p117 = scmp.eq.s32.totalorder %s116, 0
      %s119 = sadd.s32 %s118, 1
      %s120 = scalar_select %p117, %s118, %s119
      %p123 = pneg %p117
      %p124 = scmp.eq.s32.totalorder %s16, 178
      %p125 = por %p123, %p124
      %p126 = scmp.ne.s32.totalorder %s118, %s121
      %p127 = scmp.eq.s32.totalorder %s16, 0
      %p128 = por %p126, %p127
      %p129 = scmp.ne.s32.totalorder %s118, %s121
      %p130 = scmp.eq.s32.totalorder %s21, 178
      %p131 = por %p129, %p130
      %p132 = scmp.ne.s32.totalorder %s121, %s122
      %p133 = scmp.eq.s32.totalorder %s21, 0
      %p134 = por %p132, %p133
      %p135 = scmp.ne.s32.totalorder %s121, %s122
      %p136 = scmp.eq.s32.totalorder %s22, 178
      %p137 = por %p135, %p136
      %p139 = scmp.ne.s32.totalorder %s122, %s138
      %p140 = scmp.eq.s32.totalorder %s22, 0
      %p141 = por %p139, %p140
      %p142 = scmp.le.s32.totalorder 1, %s16
      %p143 = scmp.lt.s32.totalorder %s16, 180
      %p144 = pnand %p142, %p143
      %p145 = pneg %p144
      // Predicated region
      $region9: #{tpu_custom_call.1} parent=5 // pred_check
        _
      $region10: #{tpu_custom_call.1} parent=5 // pred_check_branch
        %147 = sbr.rel (%p144) target = $region12
      $region11: #{tpu_custom_call.1} parent=5 // pred_region
        %s148 = ssub.s32 %s16, 1
        // Predicated region
        $region13: #{tpu_custom_call.1} parent=11 // pred_check
          %p149 = pneg %p80
        $region14: #{tpu_custom_call.1} parent=11 // pred_check_branch
          %151 = sbr.rel (%p149) target = $region16
        $region15: #{tpu_custom_call.1} parent=11 // pred_region
          %s153 = ssub.s32 1024, 1024
          %154 = vsyncadd [#allocation6], %s153
          %s155 = smul.addr %s26, 64
          %s156 = scalar_lea.hbm %s1, %s155
          %s157 = sshll.u32 [#allocation5], 4
          %s158 = int_to_ptr.vmem [resolvable:$true] %s157
          %163 = dma.hbm_to_vmem [thread:$0]  %s156, 1024, %s158, [#allocation6], 64, 64, 4
        $region16: #{tpu_custom_call.1} parent=11 // pred_fallthru
          _
        // Predicated region
        $region17: #{tpu_custom_call.1} parent=11 // pred_check
          %p164 = pneg %p106
        $region18: #{tpu_custom_call.1} parent=11 // pred_check_branch
          %166 = sbr.rel (%p164) target = $region20
        $region19: #{tpu_custom_call.1} parent=11 // pred_region
          %s168 = ssub.s32 16, 16
          %169 = vsyncadd [#allocation6], %s168
          %s170 = smul.addr %s26, 16
          %s171 = scalar_lea.hbm %s2, %s170
          %s173 = sshll.u32 [#allocation7], 4
          %s174 = int_to_ptr.vmem [resolvable:$true] %s173
          %176 = dma.hbm_to_vmem [thread:$0]  %s171, 16, %s174, [#allocation6]
        $region20: #{tpu_custom_call.1} parent=11 // pred_fallthru
          _
      $region12: #{tpu_custom_call.1} parent=5 // pred_fallthru
        _
      %p177 = scmp.lt.s32.totalorder %s16, 179
      // Predicated region
      $region21: #{tpu_custom_call.1} parent=5 // pred_check
        %p178 = pneg %p177
      $region22: #{tpu_custom_call.1} parent=5 // pred_check_branch
        %180 = sbr.rel (%p178) target = $region24
      $region23: #{tpu_custom_call.1} parent=5 // pred_region
        // Predicated region
        $region25: #{tpu_custom_call.1} parent=23 // pred_check
          %p181 = pneg %p48
        $region26: #{tpu_custom_call.1} parent=23 // pred_check_branch
          %183 = sbr.rel (%p181) target = $region28
        $region27: #{tpu_custom_call.1} parent=23 // pred_region
          %s184 = sand.u32 %s38, 1
          %s185 = scalar_lea.sflag [#allocation3], %s184
          %s186 = sand.u32 %s38, 1
          %s187 = smul.addr %s186, 256
          %s188 = scalar_lea.vmem [#allocation2], %s187
          %s189 = smul.u32 64, %s23
          %s191 = ssub.s32 4096, 4096
          %192 = vsyncadd %s185, %s191
          %s193 = smul.addr %s189, 64
          %s194 = scalar_lea.hbm %s0, %s193
          %s195 = sshll.u32 %s188, 4
          %s196 = int_to_ptr.vmem [resolvable:$true] %s195
          %201 = dma.hbm_to_vmem [thread:$0]  %s194, 4096, %s196, %s185, 64, 64, 4
        $region28: #{tpu_custom_call.1} parent=23 // pred_fallthru
          _
      $region24: #{tpu_custom_call.1} parent=5 // pred_fallthru
        _
      %p202 = scmp.le.s32.totalorder 1, %s16
      %p203 = scmp.lt.s32.totalorder %s16, 180
      %p204 = pnand %p202, %p203
      %p205 = pneg %p204
      // Predicated region
      $region29: #{tpu_custom_call.1} parent=5 // pred_check
        _
      $region30: #{tpu_custom_call.1} parent=5 // pred_check_branch
        %207 = sbr.rel (%p204) target = $region32
      $region31: #{tpu_custom_call.1} parent=5 // pred_region
        %s208 = ssub.s32 %s16, 1
        %s209 = sand.u32 %s41, 1
        %s210 = scalar_lea.sflag [#allocation3], %s209
        %s211 = sand.u32 %s41, 1
        %s212 = smul.addr %s211, 256
        %s213 = scalar_lea.vmem [#allocation2], %s212
        // Predicated region
        $region33: #{tpu_custom_call.1} parent=31 // pred_check
          %p214 = pneg %p54
        $region34: #{tpu_custom_call.1} parent=31 // pred_check_branch
          %216 = sbr.rel (%p214) target = $region36
        $region35: #{tpu_custom_call.1} parent=31 // pred_region
          %217 = dma.done %s210, 4096
        $region36: #{tpu_custom_call.1} parent=31 // pred_fallthru
          _
        // Predicated region
        $region37: #{tpu_custom_call.1} parent=31 // pred_check
          %p218 = pneg %p80
        $region38: #{tpu_custom_call.1} parent=31 // pred_check_branch
          %220 = sbr.rel (%p218) target = $region40
        $region39: #{tpu_custom_call.1} parent=31 // pred_region
          %221 = dma.done [#allocation6], 1024
        $region40: #{tpu_custom_call.1} parent=31 // pred_fallthru
          _
        // Predicated region
        $region41: #{tpu_custom_call.1} parent=31 // pred_check
          %p222 = pneg %p106
        $region42: #{tpu_custom_call.1} parent=31 // pred_check_branch
          %224 = sbr.rel (%p222) target = $region44
        $region43: #{tpu_custom_call.1} parent=31 // pred_region
          %225 = dma.done [#allocation6], 16
        $region44: #{tpu_custom_call.1} parent=31 // pred_fallthru
          _
        %s226 = sand.u32 %s41, 1
        %s227 = scalar_lea.sflag [#allocation3], %s226
        %s228 = sand.u32 %s41, 1
        %s229 = smul.addr %s228, 256
        %s230 = scalar_lea.vmem [#allocation2], %s229
        %p231 = pneg %p54
        %p232 = pneg %p51
        %p233 = pneg %p80
        %p234 = pneg %p77
        %p235 = pneg %p106
        %p236 = pneg %p103
        %p237 = pneg %p134
        %p238 = pneg %p131
        %s239 = sand.u32 %s121, 1
        %s240 = scalar_lea.sflag [#allocation4], %s239
        %s241 = sand.u32 %s121, 1
        %s242 = smul.addr %s241, 512
        %s243 = scalar_lea.vmem [#allocation8], %s242
        %s244 = smul.u32 64, %s25
        %s245 = smul.u32 64, %s25
        %v247 = vld [vmem:[%s213] sm:$0xf]
        %v248 = vld [vmem:[%s213 + $0x4] sm:$0xf]
        %v249 = vld [vmem:[%s213 + $0x8] sm:$0xf]
        %v250 = vld [vmem:[%s213 + $0xc] sm:$0xf]
        %v251 = vld [vmem:[%s213 + $0x10] sm:$0xf]
        %v252 = vld [vmem:[%s213 + $0x14] sm:$0xf]
        %v253 = vld [vmem:[%s213 + $0x18] sm:$0xf]
        %v254 = vld [vmem:[%s213 + $0x1c] sm:$0xf]
        %v255 = vld [vmem:[%s213 + $0x20] sm:$0xf]
        %v256 = vld [vmem:[%s213 + $0x24] sm:$0xf]
        %v257 = vld [vmem:[%s213 + $0x28] sm:$0xf]
        %v258 = vld [vmem:[%s213 + $0x2c] sm:$0xf]
        %v259 = vld [vmem:[%s213 + $0x30] sm:$0xf]
        %v260 = vld [vmem:[%s213 + $0x34] sm:$0xf]
        %v261 = vld [vmem:[%s213 + $0x38] sm:$0xf]
        %v262 = vld [vmem:[%s213 + $0x3c] sm:$0xf]
        %v263 = vld [vmem:[%s213 + $0x40] sm:$0xf]
        %v264 = vld [vmem:[%s213 + $0x44] sm:$0xf]
        %v265 = vld [vmem:[%s213 + $0x48] sm:$0xf]
        %v266 = vld [vmem:[%s213 + $0x4c] sm:$0xf]
        %v267 = vld [vmem:[%s213 + $0x50] sm:$0xf]
        %v268 = vld [vmem:[%s213 + $0x54] sm:$0xf]
        %v269 = vld [vmem:[%s213 + $0x58] sm:$0xf]
        %v270 = vld [vmem:[%s213 + $0x5c] sm:$0xf]
        %v271 = vld [vmem:[%s213 + $0x60] sm:$0xf]
        %v272 = vld [vmem:[%s213 + $0x64] sm:$0xf]
        %v273 = vld [vmem:[%s213 + $0x68] sm:$0xf]
        %v274 = vld [vmem:[%s213 + $0x6c] sm:$0xf]
        %v275 = vld [vmem:[%s213 + $0x70] sm:$0xf]
        %v276 = vld [vmem:[%s213 + $0x74] sm:$0xf]
        %v277 = vld [vmem:[%s213 + $0x78] sm:$0xf]
        %v278 = vld [vmem:[%s213 + $0x7c] sm:$0xf]
        %v279 = vld [vmem:[%s213 + $0x80] sm:$0xf]
        %v280 = vld [vmem:[%s213 + $0x84] sm:$0xf]
        %v281 = vld [vmem:[%s213 + $0x88] sm:$0xf]
        %v282 = vld [vmem:[%s213 + $0x8c] sm:$0xf]
        %v283 = vld [vmem:[%s213 + $0x90] sm:$0xf]
        %v284 = vld [vmem:[%s213 + $0x94] sm:$0xf]
        %v285 = vld [vmem:[%s213 + $0x98] sm:$0xf]
        %v286 = vld [vmem:[%s213 + $0x9c] sm:$0xf]
        %v287 = vld [vmem:[%s213 + $0xa0] sm:$0xf]
        %v288 = vld [vmem:[%s213 + $0xa4] sm:$0xf]
        %v289 = vld [vmem:[%s213 + $0xa8] sm:$0xf]
        %v290 = vld [vmem:[%s213 + $0xac] sm:$0xf]
        %v291 = vld [vmem:[%s213 + $0xb0] sm:$0xf]
        %v292 = vld [vmem:[%s213 + $0xb4] sm:$0xf]
        %v293 = vld [vmem:[%s213 + $0xb8] sm:$0xf]
        %v294 = vld [vmem:[%s213 + $0xbc] sm:$0xf]
        %v295 = vld [vmem:[%s213 + $0xc0] sm:$0xf]
        %v296 = vld [vmem:[%s213 + $0xc4] sm:$0xf]
        %v297 = vld [vmem:[%s213 + $0xc8] sm:$0xf]
        %v298 = vld [vmem:[%s213 + $0xcc] sm:$0xf]
        %v299 = vld [vmem:[%s213 + $0xd0] sm:$0xf]
        %v300 = vld [vmem:[%s213 + $0xd4] sm:$0xf]
        %v301 = vld [vmem:[%s213 + $0xd8] sm:$0xf]
        %v302 = vld [vmem:[%s213 + $0xdc] sm:$0xf]
        %v303 = vld [vmem:[%s213 + $0xe0] sm:$0xf]
        %v304 = vld [vmem:[%s213 + $0xe4] sm:$0xf]
        %v305 = vld [vmem:[%s213 + $0xe8] sm:$0xf]
        %v306 = vld [vmem:[%s213 + $0xec] sm:$0xf]
        %v307 = vld [vmem:[%s213 + $0xf0] sm:$0xf]
        %v308 = vld [vmem:[%s213 + $0xf4] sm:$0xf]
        %v309 = vld [vmem:[%s213 + $0xf8] sm:$0xf]
        %v310 = vld [vmem:[%s213 + $0xfc] sm:$0xf]
        %v311 = vld [vmem:[#allocation5] sm:$0xf]
        %v312 = vld [vmem:[#allocation5 + $0x4] sm:$0xf]
        %v313 = vld [vmem:[#allocation5 + $0x8] sm:$0xf]
        %v314 = vld [vmem:[#allocation5 + $0xc] sm:$0xf]
        %v315 = vld [vmem:[#allocation5 + $0x10] sm:$0xf]
        %v316 = vld [vmem:[#allocation5 + $0x14] sm:$0xf]
        %v317 = vld [vmem:[#allocation5 + $0x18] sm:$0xf]
        %v318 = vld [vmem:[#allocation5 + $0x1c] sm:$0xf]
        %v319 = vld [vmem:[#allocation5 + $0x20] sm:$0xf]
        %v320 = vld [vmem:[#allocation5 + $0x24] sm:$0xf]
        %v321 = vld [vmem:[#allocation5 + $0x28] sm:$0xf]
        %v322 = vld [vmem:[#allocation5 + $0x2c] sm:$0xf]
        %v323 = vld [vmem:[#allocation5 + $0x30] sm:$0xf]
        %v324 = vld [vmem:[#allocation5 + $0x34] sm:$0xf]
        %v325 = vld [vmem:[#allocation5 + $0x38] sm:$0xf]
        %v326 = vld [vmem:[#allocation5 + $0x3c] sm:$0xf]
        %v327 = vld [vmem:[#allocation7] sm:$0x1]
        %v329 = vlaneseq
        %v330 = vshrl.u32 %v329, 7
        %v331 = vsub.s32 0, %v330
        %v332 = vrot.slane %v327, %v331
        %v398 = vunpack.c.l.b16 %v247
        %v399 = vunpack.c.l.b16 %v248
        %v400 = vunpack.c.l.b16 %v249
        %v401 = vunpack.c.l.b16 %v250
        %v402 = vunpack.c.l.b16 %v251
        %v403 = vunpack.c.l.b16 %v252
        %v404 = vunpack.c.l.b16 %v253
        %v405 = vunpack.c.l.b16 %v254
        %v406 = vunpack.c.l.b16 %v255
        %v407 = vunpack.c.l.b16 %v256
        %v408 = vunpack.c.l.b16 %v257
        %v409 = vunpack.c.l.b16 %v258
        %v410 = vunpack.c.l.b16 %v259
        %v411 = vunpack.c.l.b16 %v260
        %v412 = vunpack.c.l.b16 %v261
        %v413 = vunpack.c.l.b16 %v262
        %v414 = vunpack.c.l.b16 %v263
        %v415 = vunpack.c.l.b16 %v264
        %v416 = vunpack.c.l.b16 %v265
        %v417 = vunpack.c.l.b16 %v266
        %v418 = vunpack.c.l.b16 %v267
        %v419 = vunpack.c.l.b16 %v268
        %v420 = vunpack.c.l.b16 %v269
        %v421 = vunpack.c.l.b16 %v270
        %v422 = vunpack.c.l.b16 %v271
        %v423 = vunpack.c.l.b16 %v272
        %v424 = vunpack.c.l.b16 %v273
        %v425 = vunpack.c.l.b16 %v274
        %v426 = vunpack.c.l.b16 %v275
        %v427 = vunpack.c.l.b16 %v276
        %v428 = vunpack.c.l.b16 %v277
        %v429 = vunpack.c.l.b16 %v278
        %v430 = vunpack.c.l.b16 %v279
        %v431 = vunpack.c.l.b16 %v280
        %v432 = vunpack.c.l.b16 %v281
        %v433 = vunpack.c.l.b16 %v282
        %v434 = vunpack.c.l.b16 %v283
        %v435 = vunpack.c.l.b16 %v284
        %v436 = vunpack.c.l.b16 %v285
        %v437 = vunpack.c.l.b16 %v286
        %v438 = vunpack.c.l.b16 %v287
        %v439 = vunpack.c.l.b16 %v288
        %v440 = vunpack.c.l.b16 %v289
        %v441 = vunpack.c.l.b16 %v290
        %v442 = vunpack.c.l.b16 %v291
        %v443 = vunpack.c.l.b16 %v292
        %v444 = vunpack.c.l.b16 %v293
        %v445 = vunpack.c.l.b16 %v294
        %v446 = vunpack.c.l.b16 %v295
        %v447 = vunpack.c.l.b16 %v296
        %v448 = vunpack.c.l.b16 %v297
        %v449 = vunpack.c.l.b16 %v298
        %v450 = vunpack.c.l.b16 %v299
        %v451 = vunpack.c.l.b16 %v300
        %v452 = vunpack.c.l.b16 %v301
        %v453 = vunpack.c.l.b16 %v302
        %v454 = vunpack.c.l.b16 %v303
        %v455 = vunpack.c.l.b16 %v304
        %v456 = vunpack.c.l.b16 %v305
        %v457 = vunpack.c.l.b16 %v306
        %v458 = vunpack.c.l.b16 %v307
        %v459 = vunpack.c.l.b16 %v308
        %v460 = vunpack.c.l.b16 %v309
        %v461 = vunpack.c.l.b16 %v310
        %v462 = vpack.c.b16 %v399, %v398
        %v463 = vpack.c.b16 %v401, %v400
        %v464 = vpack.c.b16 %v403, %v402
        %v465 = vpack.c.b16 %v405, %v404
        %v466 = vpack.c.b16 %v407, %v406
        %v467 = vpack.c.b16 %v409, %v408
        %v468 = vpack.c.b16 %v411, %v410
        %v469 = vpack.c.b16 %v413, %v412
        %v470 = vpack.c.b16 %v415, %v414
        %v471 = vpack.c.b16 %v417, %v416
        %v472 = vpack.c.b16 %v419, %v418
        %v473 = vpack.c.b16 %v421, %v420
        %v474 = vpack.c.b16 %v423, %v422
        %v475 = vpack.c.b16 %v425, %v424
        %v476 = vpack.c.b16 %v427, %v426
        %v477 = vpack.c.b16 %v429, %v428
        %v478 = vpack.c.b16 %v431, %v430
        %v479 = vpack.c.b16 %v433, %v432
        %v480 = vpack.c.b16 %v435, %v434
        %v481 = vpack.c.b16 %v437, %v436
        %v482 = vpack.c.b16 %v439, %v438
        %v483 = vpack.c.b16 %v441, %v440
        %v484 = vpack.c.b16 %v443, %v442
        %v485 = vpack.c.b16 %v445, %v444
        %v486 = vpack.c.b16 %v447, %v446
        %v487 = vpack.c.b16 %v449, %v448
        %v488 = vpack.c.b16 %v451, %v450
        %v489 = vpack.c.b16 %v453, %v452
        %v490 = vpack.c.b16 %v455, %v454
        %v491 = vpack.c.b16 %v457, %v456
        %v492 = vpack.c.b16 %v459, %v458
        %v493 = vpack.c.b16 %v461, %v460
        %v542 = vunpack.c.l.b16 %v311
        %v543 = vunpack.c.l.b16 %v312
        %v544 = vunpack.c.l.b16 %v313
        %v545 = vunpack.c.l.b16 %v314
        %v546 = vunpack.c.l.b16 %v315
        %v547 = vunpack.c.l.b16 %v316
        %v548 = vunpack.c.l.b16 %v317
        %v549 = vunpack.c.l.b16 %v318
        %v550 = vunpack.c.l.b16 %v319
        %v551 = vunpack.c.l.b16 %v320
        %v552 = vunpack.c.l.b16 %v321
        %v553 = vunpack.c.l.b16 %v322
        %v554 = vunpack.c.l.b16 %v323
        %v555 = vunpack.c.l.b16 %v324
        %v556 = vunpack.c.l.b16 %v325
        %v557 = vunpack.c.l.b16 %v326
        %v558 = vpack.c.b16 %v543, %v542
        %v559 = vpack.c.b16 %v545, %v544
        %v560 = vpack.c.b16 %v547, %v546
        %v561 = vpack.c.b16 %v549, %v548
        %v562 = vpack.c.b16 %v551, %v550
        %v563 = vpack.c.b16 %v553, %v552
        %v564 = vpack.c.b16 %v555, %v554
        %v565 = vpack.c.b16 %v557, %v556
        %574 = vmatprep.subr.bf16.mxu0 0
        %575 = vmatpush1.bf16.msra.mxu0 %v558
        %576 = vmatprep.subr.bf16.mxu0 0
        %577 = vmatpush1.bf16.msra.mxu0 %v559
        %578 = vmatprep.subr.bf16.mxu0 0
        %579 = vmatpush1.bf16.msra.mxu0 %v560
        %580 = vmatprep.subr.bf16.mxu0 0
        %581 = vmatpush1.bf16.msra.mxu0 %v561
        %582 = vmatprep.subr.bf16.mxu0 0
        %583 = vmatpush1.bf16.msra.mxu0 %v562
        %584 = vmatprep.subr.bf16.mxu0 0
        %585 = vmatpush1.bf16.msra.mxu0 %v563
        %586 = vmatprep.subr.bf16.mxu0 0
        %587 = vmatpush1.bf16.msra.mxu0 %v564
        %588 = vmatprep.subr.bf16.mxu0 0
        %589 = vmatpush1.bf16.msra.mxu0 %v565
        %590 = vmatprep.subr.bf16.mxu0 0
        %591 = vmatpush1.bf16.msra.mxu0 0
        %592 = vmatprep.subr.bf16.mxu0 0
        %593 = vmatpush1.bf16.msra.mxu0 0
        %594 = vmatprep.subr.bf16.mxu0 0
        %595 = vmatpush1.bf16.msra.mxu0 0
        %596 = vmatprep.subr.bf16.mxu0 0
        %597 = vmatpush1.bf16.msra.mxu0 0
        %598 = vmatprep.subr.bf16.mxu0 0
        %599 = vmatpush1.bf16.msra.mxu0 0
        %600 = vmatprep.subr.bf16.mxu0 0
        %601 = vmatpush1.bf16.msra.mxu0 0
        %602 = vmatprep.subr.bf16.mxu0 0
        %603 = vmatpush1.bf16.msra.mxu0 0
        %604 = vmatprep.subr.bf16.mxu0 0
        %605 = vmatpush1.bf16.msra.mxu0 0
        %606 = vmatprep.mubr.bf16.mxu0 0
        %607 = vmatmul.mubr.bf16.gmra.mrb[0].mxu0 %v462
        %v608 = vpop.f32.mrb[0].mxu0
        %v609 = vadd.f32 %v332, %v608
        %v610 = vpop.f32.mrb[0].mxu0
        %v611 = vpop.f32.mrb[0].mxu0
        %v612 = vadd.f32 %v332, %v611
        %v613 = vpop.f32.mrb[0].mxu0
        %614 = vmatprep.mubr.bf16.mxu0 0
        %615 = vmatmul.mubr.bf16.gmra.mrb[0].mxu0 %v463
        %v616 = vpop.f32.mrb[0].mxu0
        %v617 = vadd.f32 %v332, %v616
        %v618 = vpop.f32.mrb[0].mxu0
        %v619 = vpop.f32.mrb[0].mxu0
        %v620 = vadd.f32 %v332, %v619
        %v621 = vpop.f32.mrb[0].mxu0
        %622 = vmatprep.mubr.bf16.mxu0 0
        %623 = vmatmul.mubr.bf16.gmra.mrb[0].mxu0 %v464
        %v624 = vpop.f32.mrb[0].mxu0
        %v625 = vadd.f32 %v332, %v624
        %v626 = vpop.f32.mrb[0].mxu0
        %v627 = vpop.f32.mrb[0].mxu0
        %v628 = vadd.f32 %v332, %v627
        %v629 = vpop.f32.mrb[0].mxu0
        %630 = vmatprep.mubr.bf16.mxu0 0
        %631 = vmatmul.mubr.bf16.gmra.mrb[0].mxu0 %v465
        %v632 = vpop.f32.mrb[0].mxu0
        %v633 = vadd.f32 %v332, %v632
        %v634 = vpop.f32.mrb[0].mxu0
        %v635 = vpop.f32.mrb[0].mxu0
        %v636 = vadd.f32 %v332, %v635
        %v637 = vpop.f32.mrb[0].mxu0
        %638 = vmatprep.mubr.bf16.mxu0 0
        %639 = vmatmul.mubr.bf16.gmra.mrb[0].mxu0 %v466
        %v640 = vpop.f32.mrb[0].mxu0
        %v641 = vadd.f32 %v332, %v640
        %v642 = vpop.f32.mrb[0].mxu0
        %v643 = vpop.f32.mrb[0].mxu0
        %v644 = vadd.f32 %v332, %v643
        %v645 = vpop.f32.mrb[0].mxu0
        %646 = vmatprep.mubr.bf16.mxu0 0
        %647 = vmatmul.mubr.bf16.gmra.mrb[0].mxu0 %v467
        %v648 = vpop.f32.mrb[0].mxu0
        %v649 = vadd.f32 %v332, %v648
        %v650 = vpop.f32.mrb[0].mxu0
        %v651 = vpop.f32.mrb[0].mxu0
        %v652 = vadd.f32 %v332, %v651
        %v653 = vpop.f32.mrb[0].mxu0
        %654 = vmatprep.mubr.bf16.mxu0 0
        %655 = vmatmul.mubr.bf16.gmra.mrb[0].mxu0 %v468
        %v656 = vpop.f32.mrb[0].mxu0
        %v657 = vadd.f32 %v332, %v656
        %v658 = vpop.f32.mrb[0].mxu0
        %v659 = vpop.f32.mrb[0].mxu0
        %v660 = vadd.f32 %v332, %v659
        %v661 = vpop.f32.mrb[0].mxu0
        %662 = vmatprep.mubr.bf16.mxu0 0
        %663 = vmatmul.mubr.bf16.gmra.mrb[0].mxu0 %v469
        %v664 = vpop.f32.mrb[0].mxu0
        %v665 = vadd.f32 %v332, %v664
        %v666 = vpop.f32.mrb[0].mxu0
        %v667 = vpop.f32.mrb[0].mxu0
        %v668 = vadd.f32 %v332, %v667
        %v669 = vpop.f32.mrb[0].mxu0
        %670 = vmatprep.mubr.bf16.mxu0 0
        %671 = vmatmul.mubr.bf16.gmra.mrb[0].mxu0 %v470
        %v672 = vpop.f32.mrb[0].mxu0
        %v673 = vadd.f32 %v332, %v672
        %v674 = vpop.f32.mrb[0].mxu0
        %v675 = vpop.f32.mrb[0].mxu0
        %v676 = vadd.f32 %v332, %v675
        %v677 = vpop.f32.mrb[0].mxu0
        %678 = vmatprep.mubr.bf16.mxu0 0
        %679 = vmatmul.mubr.bf16.gmra.mrb[0].mxu0 %v471
        %v680 = vpop.f32.mrb[0].mxu0
        %v681 = vadd.f32 %v332, %v680
        %v682 = vpop.f32.mrb[0].mxu0
        %v683 = vpop.f32.mrb[0].mxu0
        %v684 = vadd.f32 %v332, %v683
        %v685 = vpop.f32.mrb[0].mxu0
        %686 = vmatprep.mubr.bf16.mxu0 0
        %687 = vmatmul.mubr.bf16.gmra.mrb[0].mxu0 %v472
        %v688 = vpop.f32.mrb[0].mxu0
        %v689 = vadd.f32 %v332, %v688
        %v690 = vpop.f32.mrb[0].mxu0
        %v691 = vpop.f32.mrb[0].mxu0
        %v692 = vadd.f32 %v332, %v691
        %v693 = vpop.f32.mrb[0].mxu0
        %694 = vmatprep.mubr.bf16.mxu0 0
        %695 = vmatmul.mubr.bf16.gmra.mrb[0].mxu0 %v473
        %v696 = vpop.f32.mrb[0].mxu0
        %v697 = vadd.f32 %v332, %v696
        %v698 = vpop.f32.mrb[0].mxu0
        %v699 = vpop.f32.mrb[0].mxu0
        %v700 = vadd.f32 %v332, %v699
        %v701 = vpop.f32.mrb[0].mxu0
        %702 = vmatprep.mubr.bf16.mxu0 0
        %703 = vmatmul.mubr.bf16.gmra.mrb[0].mxu0 %v474
        %v704 = vpop.f32.mrb[0].mxu0
        %v705 = vadd.f32 %v332, %v704
        %v706 = vpop.f32.mrb[0].mxu0
        %v707 = vpop.f32.mrb[0].mxu0
        %v708 = vadd.f32 %v332, %v707
        %v709 = vpop.f32.mrb[0].mxu0
        %710 = vmatprep.mubr.bf16.mxu0 0
        %711 = vmatmul.mubr.bf16.gmra.mrb[0].mxu0 %v475
        %v712 = vpop.f32.mrb[0].mxu0
        %v713 = vadd.f32 %v332, %v712
        %v714 = vpop.f32.mrb[0].mxu0
        %v715 = vpop.f32.mrb[0].mxu0
        %v716 = vadd.f32 %v332, %v715
        %v717 = vpop.f32.mrb[0].mxu0
        %718 = vmatprep.mubr.bf16.mxu0 0
        %719 = vmatmul.mubr.bf16.gmra.mrb[0].mxu0 %v476
        %v720 = vpop.f32.mrb[0].mxu0
        %v721 = vadd.f32 %v332, %v720
        %v722 = vpop.f32.mrb[0].mxu0
        %v723 = vpop.f32.mrb[0].mxu0
        %v724 = vadd.f32 %v332, %v723
        %v725 = vpop.f32.mrb[0].mxu0
        %726 = vmatprep.mubr.bf16.mxu0 0
        %727 = vmatmul.mubr.bf16.gmra.mrb[0].mxu0 %v477
        %v728 = vpop.f32.mrb[0].mxu0
        %v729 = vadd.f32 %v332, %v728
        %v730 = vpop.f32.mrb[0].mxu0
        %v731 = vpop.f32.mrb[0].mxu0
        %v732 = vadd.f32 %v332, %v731
        %v733 = vpop.f32.mrb[0].mxu0
        %734 = vmatprep.mubr.bf16.mxu0 0
        %735 = vmatmul.mubr.bf16.gmra.mrb[0].mxu0 %v478
        %v736 = vpop.f32.mrb[0].mxu0
        %v737 = vadd.f32 %v332, %v736
        %v738 = vpop.f32.mrb[0].mxu0
        %v739 = vpop.f32.mrb[0].mxu0
        %v740 = vadd.f32 %v332, %v739
        %v741 = vpop.f32.mrb[0].mxu0
        %742 = vmatprep.mubr.bf16.mxu0 0
        %743 = vmatmul.mubr.bf16.gmra.mrb[0].mxu0 %v479
        %v744 = vpop.f32.mrb[0].mxu0
        %v745 = vadd.f32 %v332, %v744
        %v746 = vpop.f32.mrb[0].mxu0
        %v747 = vpop.f32.mrb[0].mxu0
        %v748 = vadd.f32 %v332, %v747
        %v749 = vpop.f32.mrb[0].mxu0
        %750 = vmatprep.mubr.bf16.mxu0 0
        %751 = vmatmul.mubr.bf16.gmra.mrb[0].mxu0 %v480
        %v752 = vpop.f32.mrb[0].mxu0
        %v753 = vadd.f32 %v332, %v752
        %v754 = vpop.f32.mrb[0].mxu0
        %v755 = vpop.f32.mrb[0].mxu0
        %v756 = vadd.f32 %v332, %v755
        %v757 = vpop.f32.mrb[0].mxu0
        %758 = vmatprep.mubr.bf16.mxu0 0
        %759 = vmatmul.mubr.bf16.gmra.mrb[0].mxu0 %v481
        %v760 = vpop.f32.mrb[0].mxu0
        %v761 = vadd.f32 %v332, %v760
        %v762 = vpop.f32.mrb[0].mxu0
        %v763 = vpop.f32.mrb[0].mxu0
        %v764 = vadd.f32 %v332, %v763
        %v765 = vpop.f32.mrb[0].mxu0
        %766 = vmatprep.mubr.bf16.mxu0 0
        %767 = vmatmul.mubr.bf16.gmra.mrb[0].mxu0 %v482
        %v768 = vpop.f32.mrb[0].mxu0
        %v769 = vadd.f32 %v332, %v768
        %v770 = vpop.f32.mrb[0].mxu0
        %v771 = vpop.f32.mrb[0].mxu0
        %v772 = vadd.f32 %v332, %v771
        %v773 = vpop.f32.mrb[0].mxu0
        %774 = vmatprep.mubr.bf16.mxu0 0
        %775 = vmatmul.mubr.bf16.gmra.mrb[0].mxu0 %v483
        %v776 = vpop.f32.mrb[0].mxu0
        %v777 = vadd.f32 %v332, %v776
        %v778 = vpop.f32.mrb[0].mxu0
        %v779 = vpop.f32.mrb[0].mxu0
        %v780 = vadd.f32 %v332, %v779
        %v781 = vpop.f32.mrb[0].mxu0
        %782 = vmatprep.mubr.bf16.mxu0 0
        %783 = vmatmul.mubr.bf16.gmra.mrb[0].mxu0 %v484
        %v784 = vpop.f32.mrb[0].mxu0
        %v785 = vadd.f32 %v332, %v784
        %v786 = vpop.f32.mrb[0].mxu0
        %v787 = vpop.f32.mrb[0].mxu0
        %v788 = vadd.f32 %v332, %v787
        %v789 = vpop.f32.mrb[0].mxu0
        %790 = vmatprep.mubr.bf16.mxu0 0
        %791 = vmatmul.mubr.bf16.gmra.mrb[0].mxu0 %v485
        %v792 = vpop.f32.mrb[0].mxu0
        %v793 = vadd.f32 %v332, %v792
        %v794 = vpop.f32.mrb[0].mxu0
        %v795 = vpop.f32.mrb[0].mxu0
        %v796 = vadd.f32 %v332, %v795
        %v797 = vpop.f32.mrb[0].mxu0
        %798 = vmatprep.mubr.bf16.mxu0 0
        %799 = vmatmul.mubr.bf16.gmra.mrb[0].mxu0 %v486
        %v800 = vpop.f32.mrb[0].mxu0
        %v801 = vadd.f32 %v332, %v800
        %v802 = vpop.f32.mrb[0].mxu0
        %v803 = vpop.f32.mrb[0].mxu0
        %v804 = vadd.f32 %v332, %v803
        %v805 = vpop.f32.mrb[0].mxu0
        %806 = vmatprep.mubr.bf16.mxu0 0
        %807 = vmatmul.mubr.bf16.gmra.mrb[0].mxu0 %v487
        %v808 = vpop.f32.mrb[0].mxu0
        %v809 = vadd.f32 %v332, %v808
        %v810 = vpop.f32.mrb[0].mxu0
        %v811 = vpop.f32.mrb[0].mxu0
        %v812 = vadd.f32 %v332, %v811
        %v813 = vpop.f32.mrb[0].mxu0
        %814 = vmatprep.mubr.bf16.mxu0 0
        %815 = vmatmul.mubr.bf16.gmra.mrb[0].mxu0 %v488
        %v816 = vpop.f32.mrb[0].mxu0
        %v817 = vadd.f32 %v332, %v816
        %v818 = vpop.f32.mrb[0].mxu0
        %v819 = vpop.f32.mrb[0].mxu0
        %v820 = vadd.f32 %v332, %v819
        %v821 = vpop.f32.mrb[0].mxu0
        %822 = vmatprep.mubr.bf16.mxu0 0
        %823 = vmatmul.mubr.bf16.gmra.mrb[0].mxu0 %v489
        %v824 = vpop.f32.mrb[0].mxu0
        %v825 = vadd.f32 %v332, %v824
        %v826 = vpop.f32.mrb[0].mxu0
        %v827 = vpop.f32.mrb[0].mxu0
        %v828 = vadd.f32 %v332, %v827
        %v829 = vpop.f32.mrb[0].mxu0
        %830 = vmatprep.mubr.bf16.mxu0 0
        %831 = vmatmul.mubr.bf16.gmra.mrb[0].mxu0 %v490
        %v832 = vpop.f32.mrb[0].mxu0
        %v833 = vadd.f32 %v332, %v832
        %v834 = vpop.f32.mrb[0].mxu0
        %v835 = vpop.f32.mrb[0].mxu0
        %v836 = vadd.f32 %v332, %v835
        %v837 = vpop.f32.mrb[0].mxu0
        %838 = vmatprep.mubr.bf16.mxu0 0
        %839 = vmatmul.mubr.bf16.gmra.mrb[0].mxu0 %v491
        %v840 = vpop.f32.mrb[0].mxu0
        %v841 = vadd.f32 %v332, %v840
        %v842 = vpop.f32.mrb[0].mxu0
        %v843 = vpop.f32.mrb[0].mxu0
        %v844 = vadd.f32 %v332, %v843
        %v845 = vpop.f32.mrb[0].mxu0
        %846 = vmatprep.mubr.bf16.mxu0 0
        %847 = vmatmul.mubr.bf16.gmra.mrb[0].mxu0 %v492
        %v848 = vpop.f32.mrb[0].mxu0
        %v849 = vadd.f32 %v332, %v848
        %v850 = vpop.f32.mrb[0].mxu0
        %v851 = vpop.f32.mrb[0].mxu0
        %v852 = vadd.f32 %v332, %v851
        %v853 = vpop.f32.mrb[0].mxu0
        %854 = vmatprep.mubr.bf16.mxu0 0
        %855 = vmatmul.mubr.bf16.gmra.mrb[0].mxu0 %v493
        %v856 = vpop.f32.mrb[0].mxu0
        %v857 = vadd.f32 %v332, %v856
        %v858 = vpop.f32.mrb[0].mxu0
        %v859 = vpop.f32.mrb[0].mxu0
        %v860 = vadd.f32 %v332, %v859
        %v861 = vpop.f32.mrb[0].mxu0
        %862 = vdwg.mxu0
        %v863 = vmax.f32 %v609, 0.0
        %v864 = vmax.f32 %v612, 0.0
        %v865 = vmax.f32 %v617, 0.0
        %v866 = vmax.f32 %v620, 0.0
        %v867 = vmax.f32 %v625, 0.0
        %v868 = vmax.f32 %v628, 0.0
        %v869 = vmax.f32 %v633, 0.0
        %v870 = vmax.f32 %v636, 0.0
        %v871 = vmax.f32 %v641, 0.0
        %v872 = vmax.f32 %v644, 0.0
        %v873 = vmax.f32 %v649, 0.0
        %v874 = vmax.f32 %v652, 0.0
        %v875 = vmax.f32 %v657, 0.0
        %v876 = vmax.f32 %v660, 0.0
        %v877 = vmax.f32 %v665, 0.0
        %v878 = vmax.f32 %v668, 0.0
        %v879 = vmax.f32 %v673, 0.0
        %v880 = vmax.f32 %v676, 0.0
        %v881 = vmax.f32 %v681, 0.0
        %v882 = vmax.f32 %v684, 0.0
        %v883 = vmax.f32 %v689, 0.0
        %v884 = vmax.f32 %v692, 0.0
        %v885 = vmax.f32 %v697, 0.0
        %v886 = vmax.f32 %v700, 0.0
        %v887 = vmax.f32 %v705, 0.0
        %v888 = vmax.f32 %v708, 0.0
        %v889 = vmax.f32 %v713, 0.0
        %v890 = vmax.f32 %v716, 0.0
        %v891 = vmax.f32 %v721, 0.0
        %v892 = vmax.f32 %v724, 0.0
        %v893 = vmax.f32 %v729, 0.0
        %v894 = vmax.f32 %v732, 0.0
        %v895 = vmax.f32 %v737, 0.0
        %v896 = vmax.f32 %v740, 0.0
        %v897 = vmax.f32 %v745, 0.0
        %v898 = vmax.f32 %v748, 0.0
        %v899 = vmax.f32 %v753, 0.0
        %v900 = vmax.f32 %v756, 0.0
        %v901 = vmax.f32 %v761, 0.0
        %v902 = vmax.f32 %v764, 0.0
        %v903 = vmax.f32 %v769, 0.0
        %v904 = vmax.f32 %v772, 0.0
        %v905 = vmax.f32 %v777, 0.0
        %v906 = vmax.f32 %v780, 0.0
        %v907 = vmax.f32 %v785, 0.0
        %v908 = vmax.f32 %v788, 0.0
        %v909 = vmax.f32 %v793, 0.0
        %v910 = vmax.f32 %v796, 0.0
        %v911 = vmax.f32 %v801, 0.0
        %v912 = vmax.f32 %v804, 0.0
        %v913 = vmax.f32 %v809, 0.0
        %v914 = vmax.f32 %v812, 0.0
        %v915 = vmax.f32 %v817, 0.0
        %v916 = vmax.f32 %v820, 0.0
        %v917 = vmax.f32 %v825, 0.0
        %v918 = vmax.f32 %v828, 0.0
        %v919 = vmax.f32 %v833, 0.0
        %v920 = vmax.f32 %v836, 0.0
        %v921 = vmax.f32 %v841, 0.0
        %v922 = vmax.f32 %v844, 0.0
        %v923 = vmax.f32 %v849, 0.0
        %v924 = vmax.f32 %v852, 0.0
        %v925 = vmax.f32 %v857, 0.0
        %v926 = vmax.f32 %v860, 0.0
        %927 = vst [vmem:[%s243] sm:$0xff] %v863
        %928 = vst [vmem:[%s243 + $0x8] sm:$0xff] %v864
        %929 = vst [vmem:[%s243 + $0x10] sm:$0xff] %v865
        %930 = vst [vmem:[%s243 + $0x18] sm:$0xff] %v866
        %931 = vst [vmem:[%s243 + $0x20] sm:$0xff] %v867
        %932 = vst [vmem:[%s243 + $0x28] sm:$0xff] %v868
        %933 = vst [vmem:[%s243 + $0x30] sm:$0xff] %v869
        %934 = vst [vmem:[%s243 + $0x38] sm:$0xff] %v870
        %935 = vst [vmem:[%s243 + $0x40] sm:$0xff] %v871
        %936 = vst [vmem:[%s243 + $0x48] sm:$0xff] %v872
        %937 = vst [vmem:[%s243 + $0x50] sm:$0xff] %v873
        %938 = vst [vmem:[%s243 + $0x58] sm:$0xff] %v874
        %939 = vst [vmem:[%s243 + $0x60] sm:$0xff] %v875
        %940 = vst [vmem:[%s243 + $0x68] sm:$0xff] %v876
        %941 = vst [vmem:[%s243 + $0x70] sm:$0xff] %v877
        %942 = vst [vmem:[%s243 + $0x78] sm:$0xff] %v878
        %943 = vst [vmem:[%s243 + $0x80] sm:$0xff] %v879
        %944 = vst [vmem:[%s243 + $0x88] sm:$0xff] %v880
        %945 = vst [vmem:[%s243 + $0x90] sm:$0xff] %v881
        %946 = vst [vmem:[%s243 + $0x98] sm:$0xff] %v882
        %947 = vst [vmem:[%s243 + $0xa0] sm:$0xff] %v883
        %948 = vst [vmem:[%s243 + $0xa8] sm:$0xff] %v884
        %949 = vst [vmem:[%s243 + $0xb0] sm:$0xff] %v885
        %950 = vst [vmem:[%s243 + $0xb8] sm:$0xff] %v886
        %951 = vst [vmem:[%s243 + $0xc0] sm:$0xff] %v887
        %952 = vst [vmem:[%s243 + $0xc8] sm:$0xff] %v888
        %953 = vst [vmem:[%s243 + $0xd0] sm:$0xff] %v889
        %954 = vst [vmem:[%s243 + $0xd8] sm:$0xff] %v890
        %955 = vst [vmem:[%s243 + $0xe0] sm:$0xff] %v891
        %956 = vst [vmem:[%s243 + $0xe8] sm:$0xff] %v892
        %957 = vst [vmem:[%s243 + $0xf0] sm:$0xff] %v893
        %958 = vst [vmem:[%s243 + $0xf8] sm:$0xff] %v894
        %959 = vst [vmem:[%s243 + $0x100] sm:$0xff] %v895
        %960 = vst [vmem:[%s243 + $0x108] sm:$0xff] %v896
        %961 = vst [vmem:[%s243 + $0x110] sm:$0xff] %v897
        %962 = vst [vmem:[%s243 + $0x118] sm:$0xff] %v898
        %963 = vst [vmem:[%s243 + $0x120] sm:$0xff] %v899
        %964 = vst [vmem:[%s243 + $0x128] sm:$0xff] %v900
        %965 = vst [vmem:[%s243 + $0x130] sm:$0xff] %v901
        %966 = vst [vmem:[%s243 + $0x138] sm:$0xff] %v902
        %967 = vst [vmem:[%s243 + $0x140] sm:$0xff] %v903
        %968 = vst [vmem:[%s243 + $0x148] sm:$0xff] %v904
        %969 = vst [vmem:[%s243 + $0x150] sm:$0xff] %v905
        %970 = vst [vmem:[%s243 + $0x158] sm:$0xff] %v906
        %971 = vst [vmem:[%s243 + $0x160] sm:$0xff] %v907
        %972 = vst [vmem:[%s243 + $0x168] sm:$0xff] %v908
        %973 = vst [vmem:[%s243 + $0x170] sm:$0xff] %v909
        %974 = vst [vmem:[%s243 + $0x178] sm:$0xff] %v910
        %975 = vst [vmem:[%s243 + $0x180] sm:$0xff] %v911
        %976 = vst [vmem:[%s243 + $0x188] sm:$0xff] %v912
        %977 = vst [vmem:[%s243 + $0x190] sm:$0xff] %v913
        %978 = vst [vmem:[%s243 + $0x198] sm:$0xff] %v914
        %979 = vst [vmem:[%s243 + $0x1a0] sm:$0xff] %v915
        %980 = vst [vmem:[%s243 + $0x1a8] sm:$0xff] %v916
        %981 = vst [vmem:[%s243 + $0x1b0] sm:$0xff] %v917
        %982 = vst [vmem:[%s243 + $0x1b8] sm:$0xff] %v918
        %983 = vst [vmem:[%s243 + $0x1c0] sm:$0xff] %v919
        %984 = vst [vmem:[%s243 + $0x1c8] sm:$0xff] %v920
        %985 = vst [vmem:[%s243 + $0x1d0] sm:$0xff] %v921
        %986 = vst [vmem:[%s243 + $0x1d8] sm:$0xff] %v922
        %987 = vst [vmem:[%s243 + $0x1e0] sm:$0xff] %v923
        %988 = vst [vmem:[%s243 + $0x1e8] sm:$0xff] %v924
        %989 = vst [vmem:[%s243 + $0x1f0] sm:$0xff] %v925
        %990 = vst [vmem:[%s243 + $0x1f8] sm:$0xff] %v926
        %s991 = sand.u32 %s121, 1
        %s992 = scalar_lea.sflag [#allocation4], %s991
        %s993 = sand.u32 %s121, 1
        %s994 = smul.addr %s993, 512
        %s995 = scalar_lea.vmem [#allocation8], %s994
        // Predicated region
        $region45: #{tpu_custom_call.1} parent=31 // pred_check
          %p996 = pneg %p131
        $region46: #{tpu_custom_call.1} parent=31 // pred_check_branch
          %998 = sbr.rel (%p996) target = $region48
        $region47: #{tpu_custom_call.1} parent=31 // pred_region
          %s999 = smul.u32 64, %s25
          %s1001 = ssub.s32 8192, 8192
          %1002 = vsyncadd %s992, %s1001
          %s1003 = sadd.s32 %s26, %s999
          %s1004 = smul.addr %s1003, 128
          %s1005 = scalar_lea.hbm %s3, %s1004
          %s1006 = sshll.u32 %s995, 4
          %s1007 = int_to_ptr.vmem [resolvable:$true] %s1006
          %1012 = dma.vmem_to_hbm [thread:$0]  %s1007, 8192, %s1005, %s992, 128, 128, 8
        $region48: #{tpu_custom_call.1} parent=31 // pred_fallthru
          _
      $region32: #{tpu_custom_call.1} parent=5 // pred_fallthru
        _
      %p1013 = scmp.le.s32.totalorder 2, %s16
      // Predicated region
      $region49: #{tpu_custom_call.1} parent=5 // pred_check
        %p1014 = pneg %p1013
      $region50: #{tpu_custom_call.1} parent=5 // pred_check_branch
        %1016 = sbr.rel (%p1014) target = $region52
      $region51: #{tpu_custom_call.1} parent=5 // pred_region
        %s1017 = ssub.s32 %s16, 2
        // Predicated region
        $region53: #{tpu_custom_call.1} parent=51 // pred_check
          %p1018 = pneg %p137
        $region54: #{tpu_custom_call.1} parent=51 // pred_check_branch
          %1020 = sbr.rel (%p1018) target = $region56
        $region55: #{tpu_custom_call.1} parent=51 // pred_region
          %s1021 = sand.u32 %s122, 1
          %s1022 = scalar_lea.sflag [#allocation4], %s1021
          %s1023 = sand.u32 %s122, 1
          %s1024 = smul.addr %s1023, 512
          %s1025 = scalar_lea.vmem [#allocation8], %s1024
          %1026 = dma.done %s1022, 8192
        $region56: #{tpu_custom_call.1} parent=51 // pred_fallthru
          _
      $region52: #{tpu_custom_call.1} parent=5 // pred_fallthru
        _
    $region6: #{tpu_custom_call.1} parent=1 // loop_footer
      %s20 = sadd.s32 1, %s16
    $region7: #{tpu_custom_call.1} parent=1 // loop_footer_branch
      %15 = sbr.rel target = $region3
    $region8: #{tpu_custom_call.1} parent=1 // loop_exit
      _
    %1027 = vsyncpa [#allocation3], 1
    %s1028 = scalar_lea.sflag [#allocation3], 1
    %1029 = vsyncpa %s1028, 1
    %1030 = vsyncpa [#allocation6], 1
    %1031 = vsyncpa [#allocation4], 1
    %s1032 = scalar_lea.sflag [#allocation4], 1
    %1033 = vsyncpa %s1032, 1

</llo_original>
